<compile_context>
chip_gen: v5e
topology: v5e:2x2
jax: 0.10.0
libtpu: 0.0.40
codegen_flags: <defaults>
</compile_context>

<pallas_src>
import jax
import jax.numpy as jnp
from jax.experimental import pallas as pl
from jax.experimental.pallas import tpu as pltpu

HIDDEN = 256


def _mlp_kernel(x_ref, w1_ref, b1_ref, w2_ref, b2_ref, o_ref):
    # x_ref: (tm, C) bf16, w1_ref: (C, H) bf16, b1_ref: (1, H) f32,
    # w2_ref: (H, C) bf16, b2_ref: (1, C) f32, o_ref: (tm, C) f32
    x = x_ref[...]
    # First matmul: bf16 inputs, f32 accumulation on the MXU.
    h = jnp.dot(x, w1_ref[...], preferred_element_type=jnp.float32)
    # Bias-add + ReLU in f32 on the VPU (v5e has no bf16 VPU anyway).
    h = jnp.maximum(h + b1_ref[...], 0.0)
    # Back to bf16 for the second MXU pass; accumulate in f32.
    y = jnp.dot(h.astype(jnp.bfloat16), w2_ref[...],
                preferred_element_type=jnp.float32)
    y = y + b2_ref[...]
    o_ref[...] = y.astype(o_ref.dtype)


def _round_up(n, m):
    return ((n + m - 1) // m) * m


def dummy_generative_model_forward(x, t, params, *, cond=None, tm=512):
    """x: (..., C) float32 (channels last). t/cond are ignored (as in the module)."""
    del t, cond  # unused by the module's forward

    w1 = params["w1"].astype(jnp.bfloat16)   # (C, H), pre-transposed
    w2 = params["w2"].astype(jnp.bfloat16)   # (H, C), pre-transposed
    b1 = params["b1"].astype(jnp.float32)    # (1, H)
    b2 = params["b2"].astype(jnp.float32)    # (1, C)

    C = x.shape[-1]
    H = w1.shape[-1]
    lead_shape = x.shape[:-1]
    out_dtype = x.dtype

    x2d = x.reshape(-1, C).astype(jnp.bfloat16)
    M = x2d.shape[0]

    # Row tile: as large as reasonable (default 512 = multiple of 256 for
    # v6e/v7x MXUs and of 128 for v5e), clamped for tiny inputs; keep >= 2
    # grid steps when there is enough work so both v7x TensorCores get a share.
    tm_eff = min(tm, _round_up(M, 8))
    if _round_up(M, 8) > 256 and pl.cdiv(M, tm_eff) < 2:
        tm_eff = _round_up(pl.cdiv(M, 2), 8)
    n_steps = pl.cdiv(M, tm_eff)

    out = pl.pallas_call(
        _mlp_kernel,
        out_shape=jax.ShapeDtypeStruct((M, C), out_dtype),
        grid_spec=pltpu.PrefetchScalarGridSpec(
            num_scalar_prefetch=0,
            grid=(n_steps,),
            in_specs=[
                pl.BlockSpec((tm_eff, C), lambda i: (i, 0)),   # x row tile (bf16)
                pl.BlockSpec((C, H), lambda i: (0, 0)),        # W1^T, grid-invariant
                pl.BlockSpec((1, H), lambda i: (0, 0)),        # b1 (f32)
                pl.BlockSpec((H, C), lambda i: (0, 0)),        # W2^T, grid-invariant
                pl.BlockSpec((1, C), lambda i: (0, 0)),        # b2 (f32)
            ],
            out_specs=pl.BlockSpec((tm_eff, C), lambda i: (i, 0)),
        ),
        compiler_params=pltpu.CompilerParams(
            dimension_semantics=("parallel",),
        ),
    )(x2d, w1, b1, w2, b2)

    return out.reshape(*lead_shape, C)


def init_params(key, channels):
    """Deterministic parameter init (shapes match the PyTorch module)."""
    k1, k2, k3, k4, k5 = jax.random.split(key, 5)
    scale1 = 1.0 / jnp.sqrt(channels)
    scale2 = 1.0 / jnp.sqrt(HIDDEN)
    params = {
        # stored pre-transposed: (in, out)
        "w1": jax.random.uniform(k1, (channels, HIDDEN), jnp.float32, -scale1, scale1),
        "b1": jax.random.uniform(k2, (1, HIDDEN), jnp.float32, -scale1, scale1),
        "w2": jax.random.uniform(k3, (HIDDEN, channels), jnp.float32, -scale2, scale2),
        "b2": jax.random.uniform(k4, (1, channels), jnp.float32, -scale2, scale2),
        # present in the module but unused in forward
        "dummy_param": jax.random.normal(k5, (128, 128), jnp.float32),
    }
    return params


def _reference(x, params):
    h = jnp.maximum(x @ params["w1"] + params["b1"][0], 0.0)
    return h @ params["w2"] + params["b2"][0]


if __name__ == "__main__":
    key = jax.random.PRNGKey(0)
    kx, kp, kt, kx2 = jax.random.split(key, 4)

    B, N, C = 2, 8, 32          # batch=2, seq=8, channels=32
    x = jax.random.normal(kx, (B, N, C), jnp.float32)
    t = jax.random.normal(kt, (B,), jnp.float32)   # unused by forward, kept for signature parity
    params = init_params(kp, C)

    y = dummy_generative_model_forward(x, t, params)
    y = jax.block_until_ready(y)
    ref = _reference(x, params)
    assert y.shape == x.shape
    # bf16 MXU inputs with f32 accumulation -> loosened tolerance vs. the f32 reference.
    assert jnp.allclose(y, ref, atol=5e-2, rtol=5e-2)

    # Second case: multi-step grid with a partial (clipped) last block, M = 600 rows.
    x2 = jax.random.normal(kx2, (3, 200, C), jnp.float32)
    y2 = jax.block_until_ready(dummy_generative_model_forward(x2, None, params))
    ref2 = _reference(x2, params)
    assert y2.shape == x2.shape
    assert jnp.allclose(y2, ref2, atol=5e-2, rtol=5e-2)

    print("KERNEL_OK")
</pallas_src>

<mosaic_0001>
module attributes {stable_mosaic.version = 11 : i64} {
  func.func @_mlp_kernel(%arg0: i32, %arg1: memref<16x32xbf16, #tpu.memory_space<vmem>>, %arg2: memref<32x256xbf16, #tpu.memory_space<vmem>>, %arg3: memref<1x256xf32, #tpu.memory_space<vmem>>, %arg4: memref<256x32xbf16, #tpu.memory_space<vmem>>, %arg5: memref<1x32xf32, #tpu.memory_space<vmem>>, %arg6: memref<16x32xf32, #tpu.memory_space<vmem>>) attributes {dimension_semantics = [#tpu.dimension_semantics<parallel>], iteration_bounds = array<i64: 1>, scalar_prefetch = 0 : i64, scratch_operands = 0 : i64, tpu.core_type = #tpu.core_type<tc>, window_params = [{transform_indices = @transform_0, window_bounds = array<i64: 16, 32>}, {pipeline_mode = #tpu.pipeline_mode<synchronous>, transform_indices = @transform_1, window_bounds = array<i64: 32, 256>}, {pipeline_mode = #tpu.pipeline_mode<synchronous>, transform_indices = @transform_2, window_bounds = array<i64: 1, 256>}, {pipeline_mode = #tpu.pipeline_mode<synchronous>, transform_indices = @transform_3, window_bounds = array<i64: 256, 32>}, {pipeline_mode = #tpu.pipeline_mode<synchronous>, transform_indices = @transform_4, window_bounds = array<i64: 1, 32>}, {transform_indices = @transform_5, window_bounds = array<i64: 16, 32>}]} {
    %c0 = arith.constant 0 : index
    %c0_0 = arith.constant 0 : index
    %0 = vector.load %arg1[%c0, %c0_0] : memref<16x32xbf16, #tpu.memory_space<vmem>>, vector<16x32xbf16>
    %c0_1 = arith.constant 0 : index
    %c0_2 = arith.constant 0 : index
    %1 = vector.load %arg2[%c0_1, %c0_2] : memref<32x256xbf16, #tpu.memory_space<vmem>>, vector<32x256xbf16>
    %cst = arith.constant dense<0.000000e+00> : vector<16x256xf32>
    %2 = tpu.matmul %0, %1, %cst {dimension_numbers = #tpu.dot_dimension_numbers<[1], [0], [0], [1], [0, 0, 1, 1], [], []>} : vector<16x32xbf16>, vector<32x256xbf16>, vector<16x256xf32> -> vector<16x256xf32>
    %c0_3 = arith.constant 0 : index
    %c0_4 = arith.constant 0 : index
    %3 = vector.load %arg3[%c0_3, %c0_4] : memref<1x256xf32, #tpu.memory_space<vmem>>, vector<1x256xf32>
    %4 = vector.broadcast %3 : vector<1x256xf32> to vector<16x256xf32>
    %5 = arith.addf %2, %4 : vector<16x256xf32>
    %cst_5 = arith.constant 0.000000e+00 : f32
    %6 = vector.broadcast %cst_5 : f32 to vector<16x256xf32>
    %7 = arith.maximumf %5, %6 : vector<16x256xf32>
    %8 = arith.truncf %7 : vector<16x256xf32> to vector<16x256xbf16>
    %c0_6 = arith.constant 0 : index
    %c0_7 = arith.constant 0 : index
    %9 = vector.load %arg4[%c0_6, %c0_7] : memref<256x32xbf16, #tpu.memory_space<vmem>>, vector<256x32xbf16>
    %cst_8 = arith.constant dense<0.000000e+00> : vector<16x32xf32>
    %10 = tpu.matmul %8, %9, %cst_8 {dimension_numbers = #tpu.dot_dimension_numbers<[1], [0], [0], [1], [0, 0, 1, 1], [], []>} : vector<16x256xbf16>, vector<256x32xbf16>, vector<16x32xf32> -> vector<16x32xf32>
    %c0_9 = arith.constant 0 : index
    %c0_10 = arith.constant 0 : index
    %11 = vector.load %arg5[%c0_9, %c0_10] : memref<1x32xf32, #tpu.memory_space<vmem>>, vector<1x32xf32>
    %12 = vector.broadcast %11 : vector<1x32xf32> to vector<16x32xf32>
    %13 = arith.addf %10, %12 : vector<16x32xf32>
    %c0_11 = arith.constant 0 : index
    %c0_12 = arith.constant 0 : index
    %14 = vector.load %arg6[%c0_11, %c0_12] : memref<16x32xf32, #tpu.memory_space<vmem>>, vector<16x32xf32>
    tpu.vector_store %arg6[%c0_11, %c0_12], %13 {strides = array<i32>} : memref<16x32xf32, #tpu.memory_space<vmem>>, vector<16x32xf32>,
    return
  }
  func.func @transform_0(%arg0: i32) -> (i32, i32) {
    %c0_i32 = arith.constant 0 : i32
    %c0_i32_0 = arith.constant 0 : i32
    return %arg0, %c0_i32 : i32, i32
  }
  func.func @transform_1(%arg0: i32) -> (i32, i32) {
    %c0_i32 = arith.constant 0 : i32
    %c0_i32_0 = arith.constant 0 : i32
    %c0_i32_1 = arith.constant 0 : i32
    return %c0_i32, %c0_i32_0 : i32, i32
  }
  func.func @transform_2(%arg0: i32) -> (i32, i32) {
    %c0_i32 = arith.constant 0 : i32
    %c0_i32_0 = arith.constant 0 : i32
    %c0_i32_1 = arith.constant 0 : i32
    return %c0_i32, %c0_i32_0 : i32, i32
  }
  func.func @transform_3(%arg0: i32) -> (i32, i32) {
    %c0_i32 = arith.constant 0 : i32
    %c0_i32_0 = arith.constant 0 : i32
    %c0_i32_1 = arith.constant 0 : i32
    return %c0_i32, %c0_i32_0 : i32, i32
  }
  func.func @transform_4(%arg0: i32) -> (i32, i32) {
    %c0_i32 = arith.constant 0 : i32
    %c0_i32_0 = arith.constant 0 : i32
    %c0_i32_1 = arith.constant 0 : i32
    return %c0_i32, %c0_i32_0 : i32, i32
  }
  func.func @transform_5(%arg0: i32) -> (i32, i32) {
    %c0_i32 = arith.constant 0 : i32
    %c0_i32_0 = arith.constant 0 : i32
    return %arg0, %c0_i32 : i32, i32
  }
}

</mosaic_0001>

<llo_original>
// kernel: tpu_custom_call.1
$region0: #{tpu_custom_call.1}
  #allocation0 [shape = 'u32[]', space=smem, size = 0x4, offset = 0x4, fixed_abs, tag = 'smem constant byte address 0x4 - core index']
  #allocation1 [shape = 'u32[72,128]{1,0:T(1,128)}', space=vmem, size = 0x9000, scoped, tag = 'internal scratch']
  %s0 = inlined_call_operand.vmem [shape: bf16[16,32], index: 0, kind: input, shape index: {}]
  %s1 = inlined_call_operand.vmem [shape: bf16[32,256], index: 1, kind: input, shape index: {}]
  %s2 = inlined_call_operand.vmem [shape: f32[1,256], index: 2, kind: input, shape index: {}]
  %s3 = inlined_call_operand.vmem [shape: bf16[256,32], index: 3, kind: input, shape index: {}]
  %s4 = inlined_call_operand.vmem [shape: f32[1,32], index: 4, kind: input, shape index: {}]
  %s5 = inlined_call_operand.hbm [shape: f32[16,32], index: 5, kind: output, shape index: {}]
  %s6 = sld [smem:[#allocation0]]
  $region30: #{tpu_custom_call.1} parent=0
    _
  %s8 = ssub.s32 1, %s6
  %s9 = scalar_select 0, %s8, %s6
  $region1: #{tpu_custom_call.1} parent=0
    #allocation2 [shape = 'u8[8192]{0}', space=vmem, size = 0x2000, scoped, tag = 'output window, operand 0, single buffered']
    #allocation3 [shape = 's32[1]{0}', space=sflag, size = 0x4, scoped, tag = 'scoped memory for tpu_custom_call.1']
    %10 = vsyncpa [#allocation3], 0
    // Predicated region
    $region2: #{tpu_custom_call.1} parent=1 // pred_check
      _
    $region3: #{tpu_custom_call.1} parent=1 // pred_check_branch
      %12 = sbr.rel (0) target = $region5
    $region4: #{tpu_custom_call.1} parent=1 // pred_region
      _
    $region5: #{tpu_custom_call.1} parent=1 // pred_fallthru
      _
    // Predicated region
    $region6: #{tpu_custom_call.1} parent=1 // pred_check
      _
    $region7: #{tpu_custom_call.1} parent=1 // pred_check_branch
      %14 = sbr.rel (0) target = $region9
    $region8: #{tpu_custom_call.1} parent=1 // pred_region
      _
    $region9: #{tpu_custom_call.1} parent=1 // pred_fallthru
      _
    // Predicated region
    $region10: #{tpu_custom_call.1} parent=1 // pred_check
      _
    $region11: #{tpu_custom_call.1} parent=1 // pred_check_branch
      %16 = sbr.rel (0) target = $region13
    $region12: #{tpu_custom_call.1} parent=1 // pred_region
      _
    $region13: #{tpu_custom_call.1} parent=1 // pred_fallthru
      _
    // Predicated region
    $region14: #{tpu_custom_call.1} parent=1 // pred_check
      _
    $region15: #{tpu_custom_call.1} parent=1 // pred_check_branch
      %18 = sbr.rel (0) target = $region17
    $region16: #{tpu_custom_call.1} parent=1 // pred_region
      _
    $region17: #{tpu_custom_call.1} parent=1 // pred_fallthru
      _
    // Predicated region
    $region18: #{tpu_custom_call.1} parent=1 // pred_check
      _
    $region19: #{tpu_custom_call.1} parent=1 // pred_check_branch
      %20 = sbr.rel (0) target = $region21
    $region20: #{tpu_custom_call.1} parent=1 // pred_region
      _
    $region21: #{tpu_custom_call.1} parent=1 // pred_fallthru
      _
    %v22 = vld [vmem:[%s0] sm:$0xf]
    %v23 = vld [vmem:[%s0 + $0x4] sm:$0xf]
    %v24 = vld [vmem:[%s1] sm:$0xff]
    %v25 = vld [vmem:[%s1 + $0x8] sm:$0xff]
    %v26 = vld [vmem:[%s1 + $0x10] sm:$0xff]
    %v27 = vld [vmem:[%s1 + $0x18] sm:$0xff]
    %v28 = vld [vmem:[%s2] sm:$0x3]
    %v30 = vperm.slane %v28, 0
    %v31 = vperm.slane %v28, 1
    %v36 = vunpack.c.l.b16 %v22
    %v37 = vunpack.c.l.b16 %v23
    %v38 = vpack.c.b16 %v37, %v36
    %v43 = vunpack.c.l.b16 %v24
    %v44 = vunpack.c.h.b16 %v24
    %v45 = vunpack.c.l.b16 %v25
    %v46 = vunpack.c.h.b16 %v25
    %v47 = vunpack.c.l.b16 %v26
    %v48 = vunpack.c.h.b16 %v26
    %v49 = vunpack.c.l.b16 %v27
    %v50 = vunpack.c.h.b16 %v27
    %v51 = vpack.c.b16 %v45, %v43
    %v52 = vpack.c.b16 %v46, %v44
    %v53 = vpack.c.b16 %v49, %v47
    %v54 = vpack.c.b16 %v50, %v48
    %vm59 = vcmask 261120
    %v61 = vsel %vm59, %v38, 0
    %63 = vmatpush.bf16.msra.mxu0 0
    %64 = vmatpush.bf16.msra.mxu0 0
    %65 = vmatpush.bf16.msra.mxu0 0
    %66 = vmatpush.bf16.msra.mxu0 0
    %67 = vmatpush.bf16.msra.mxu0 0
    %68 = vmatpush.bf16.msra.mxu0 0
    %69 = vmatpush.bf16.msra.mxu0 %v53
    %70 = vmatpush.bf16.msra.mxu0 %v51
    %71 = vmatmul.bf16.gmra.mxu0 %v61
    %v72 = vpop.f32.mrf.mxu0
    %v73 = vadd.f32 %v30, %v72
    %v74 = vpop.f32.mrf.mxu0
    %v75 = vadd.f32 %v30, %v74
    %76 = vdwg.mxu0
    %77 = vmatpush.bf16.msra.mxu0 0
    %78 = vmatpush.bf16.msra.mxu0 0
    %79 = vmatpush.bf16.msra.mxu0 0
    %80 = vmatpush.bf16.msra.mxu0 0
    %81 = vmatpush.bf16.msra.mxu0 0
    %82 = vmatpush.bf16.msra.mxu0 0
    %83 = vmatpush.bf16.msra.mxu0 %v54
    %84 = vmatpush.bf16.msra.mxu0 %v52
    %85 = vmatmul.bf16.gmra.mxu0 %v61
    %v86 = vpop.f32.mrf.mxu0
    %v87 = vadd.f32 %v31, %v86
    %v88 = vpop.f32.mrf.mxu0
    %v89 = vadd.f32 %v31, %v88
    %90 = vdwg.mxu0
    %v91 = vmax.f32 %v73, 0.0
    %v92 = vmax.f32 %v87, 0.0
    %v93 = vmax.f32 %v75, 0.0
    %v94 = vmax.f32 %v89, 0.0
    %v95 = vpack.c.bf16 %v93, %v91
    %v96 = vpack.c.bf16 %v94, %v92
    %v97 = vld [vmem:[%s3] sm:$0xf]
    %v98 = vld [vmem:[%s3 + $0x4] sm:$0xf]
    %v99 = vld [vmem:[%s3 + $0x8] sm:$0xf]
    %v100 = vld [vmem:[%s3 + $0xc] sm:$0xf]
    %v101 = vld [vmem:[%s3 + $0x10] sm:$0xf]
    %v102 = vld [vmem:[%s3 + $0x14] sm:$0xf]
    %v103 = vld [vmem:[%s3 + $0x18] sm:$0xf]
    %v104 = vld [vmem:[%s3 + $0x1c] sm:$0xf]
    %v105 = vld [vmem:[%s3 + $0x20] sm:$0xf]
    %v106 = vld [vmem:[%s3 + $0x24] sm:$0xf]
    %v107 = vld [vmem:[%s3 + $0x28] sm:$0xf]
    %v108 = vld [vmem:[%s3 + $0x2c] sm:$0xf]
    %v109 = vld [vmem:[%s3 + $0x30] sm:$0xf]
    %v110 = vld [vmem:[%s3 + $0x34] sm:$0xf]
    %v111 = vld [vmem:[%s3 + $0x38] sm:$0xf]
    %v112 = vld [vmem:[%s3 + $0x3c] sm:$0xf]
    %v113 = vld [vmem:[%s3 + $0x40] sm:$0xf]
    %v114 = vld [vmem:[%s3 + $0x44] sm:$0xf]
    %v115 = vld [vmem:[%s3 + $0x48] sm:$0xf]
    %v116 = vld [vmem:[%s3 + $0x4c] sm:$0xf]
    %v117 = vld [vmem:[%s3 + $0x50] sm:$0xf]
    %v118 = vld [vmem:[%s3 + $0x54] sm:$0xf]
    %v119 = vld [vmem:[%s3 + $0x58] sm:$0xf]
    %v120 = vld [vmem:[%s3 + $0x5c] sm:$0xf]
    %v121 = vld [vmem:[%s3 + $0x60] sm:$0xf]
    %v122 = vld [vmem:[%s3 + $0x64] sm:$0xf]
    %v123 = vld [vmem:[%s3 + $0x68] sm:$0xf]
    %v124 = vld [vmem:[%s3 + $0x6c] sm:$0xf]
    %v125 = vld [vmem:[%s3 + $0x70] sm:$0xf]
    %v126 = vld [vmem:[%s3 + $0x74] sm:$0xf]
    %v127 = vld [vmem:[%s3 + $0x78] sm:$0xf]
    %v128 = vld [vmem:[%s3 + $0x7c] sm:$0xf]
    %v129 = vld [vmem:[%s4] sm:$0x1]
    %v131 = vperm.slane %v129, 0
    %v165 = vunpack.c.l.b16 %v97
    %v166 = vunpack.c.l.b16 %v98
    %v167 = vunpack.c.l.b16 %v99
    %v168 = vunpack.c.l.b16 %v100
    %v169 = vunpack.c.l.b16 %v101
    %v170 = vunpack.c.l.b16 %v102
    %v171 = vunpack.c.l.b16 %v103
    %v172 = vunpack.c.l.b16 %v104
    %v173 = vunpack.c.l.b16 %v105
    %v174 = vunpack.c.l.b16 %v106
    %v175 = vunpack.c.l.b16 %v107
    %v176 = vunpack.c.l.b16 %v108
    %v177 = vunpack.c.l.b16 %v109
    %v178 = vunpack.c.l.b16 %v110
    %v179 = vunpack.c.l.b16 %v111
    %v180 = vunpack.c.l.b16 %v112
    %v181 = vunpack.c.l.b16 %v113
    %v182 = vunpack.c.l.b16 %v114
    %v183 = vunpack.c.l.b16 %v115
    %v184 = vunpack.c.l.b16 %v116
    %v185 = vunpack.c.l.b16 %v117
    %v186 = vunpack.c.l.b16 %v118
    %v187 = vunpack.c.l.b16 %v119
    %v188 = vunpack.c.l.b16 %v120
    %v189 = vunpack.c.l.b16 %v121
    %v190 = vunpack.c.l.b16 %v122
    %v191 = vunpack.c.l.b16 %v123
    %v192 = vunpack.c.l.b16 %v124
    %v193 = vunpack.c.l.b16 %v125
    %v194 = vunpack.c.l.b16 %v126
    %v195 = vunpack.c.l.b16 %v127
    %v196 = vunpack.c.l.b16 %v128
    %v197 = vpack.c.b16 %v166, %v165
    %v198 = vpack.c.b16 %v168, %v167
    %v199 = vpack.c.b16 %v170, %v169
    %v200 = vpack.c.b16 %v172, %v171
    %v201 = vpack.c.b16 %v174, %v173
    %v202 = vpack.c.b16 %v176, %v175
    %v203 = vpack.c.b16 %v178, %v177
    %v204 = vpack.c.b16 %v180, %v179
    %v205 = vpack.c.b16 %v182, %v181
    %v206 = vpack.c.b16 %v184, %v183
    %v207 = vpack.c.b16 %v186, %v185
    %v208 = vpack.c.b16 %v188, %v187
    %v209 = vpack.c.b16 %v190, %v189
    %v210 = vpack.c.b16 %v192, %v191
    %v211 = vpack.c.b16 %v194, %v193
    %v212 = vpack.c.b16 %v196, %v195
    %229 = vmatpush.bf16.msra.mxu0 %v204
    %230 = vmatpush.bf16.msra.mxu0 %v203
    %231 = vmatpush.bf16.msra.mxu0 %v202
    %232 = vmatpush.bf16.msra.mxu0 %v201
    %233 = vmatpush.bf16.msra.mxu0 %v200
    %234 = vmatpush.bf16.msra.mxu0 %v199
    %235 = vmatpush.bf16.msra.mxu0 %v198
    %236 = vmatpush.bf16.msra.mxu0 %v197
    %237 = vmatmul.bf16.gmra.mxu0 %v95
    %v238 = vpop.f32.mrf.mxu0
    %v239 = vadd.f32 %v131, %v238
    %v240 = vpop.f32.mrf.mxu0
    %v241 = vadd.f32 %v131, %v240
    %242 = vdwg.mxu0
    %243 = vmatpush.bf16.msra.mxu0 %v212
    %244 = vmatpush.bf16.msra.mxu0 %v211
    %245 = vmatpush.bf16.msra.mxu0 %v210
    %246 = vmatpush.bf16.msra.mxu0 %v209
    %247 = vmatpush.bf16.msra.mxu0 %v208
    %248 = vmatpush.bf16.msra.mxu0 %v207
    %249 = vmatpush.bf16.msra.mxu0 %v206
    %250 = vmatpush.bf16.msra.mxu0 %v205
    %251 = vmatmul.bf16.gmra.mxu0 %v96
    %v252 = vpop.f32.mrf.mxu0
    %v253 = vadd.f32 %v239, %v252
    %v254 = vpop.f32.mrf.mxu0
    %v255 = vadd.f32 %v241, %v254
    %256 = vdwg.mxu0
    %257 = vst.msk [vmem:[#allocation2] sm:$0xff] %vm59, %v253
    %258 = vst.msk [vmem:[#allocation2 + $0x8] sm:$0xff] %vm59, %v255
    // Predicated region
    $region22: #{tpu_custom_call.1} parent=1 // pred_check
      _
    $region23: #{tpu_custom_call.1} parent=1 // pred_check_branch
      %260 = sbr.rel (0) target = $region25
    $region24: #{tpu_custom_call.1} parent=1 // pred_region
      %262 = vsyncadd [#allocation3], 0
      %s263 = sshll.u32 [#allocation2], 4
      %s264 = int_to_ptr.vmem [resolvable:$true] %s263
      %s265 = sshll.u32 %s5, 4
      %s266 = int_to_ptr.hbm [resolvable:$true] %s265
      %271 = dma.vmem_to_hbm [thread:$0]  %s264, 256, %s266, [#allocation3], 128, 128, 8
    $region25: #{tpu_custom_call.1} parent=1 // pred_fallthru
      _
    // Predicated region
    $region26: #{tpu_custom_call.1} parent=1 // pred_check
      _
    $region27: #{tpu_custom_call.1} parent=1 // pred_check_branch
      %273 = sbr.rel (0) target = $region29
    $region28: #{tpu_custom_call.1} parent=1 // pred_region
      %275 = dma.done [#allocation3], 256
    $region29: #{tpu_custom_call.1} parent=1 // pred_fallthru
      _
    %276 = vsyncpa [#allocation3], 1

</llo_original>
